<compile_context>
chip_gen: v5e
topology: v5e:2x2
jax: 0.10.0
libtpu: 0.0.40
codegen_flags: <defaults>
</compile_context>

<pallas_src>
import functools

import jax
import jax.numpy as jnp
from jax import lax
from jax.experimental import pallas as pl
from jax.experimental.pallas import tpu as pltpu


def _label_smoothing_kernel(pred_ref, tgt_ref, out_ref, acc_ref, *,
                            classes, smoothing, total_n, block_n,
                            tiles_per_split):
    s = pl.program_id(0)          # split (sharded across TCs on v7x)
    i = pl.program_id(1)          # reduction step within the split

    @pl.when(i == 0)
    def _():
        acc_ref[...] = jnp.zeros_like(acc_ref)

    x = pred_ref[...].astype(jnp.float32)                     # (bn, C)
    tgt = tgt_ref[...]                                        # (bn, 1) int32

    # numerically-stable log-softmax pieces (lane-axis reductions only)
    m = jnp.max(x, axis=-1, keepdims=True)                    # (bn, 1)
    lse = m + jnp.log(jnp.sum(jnp.exp(x - m), axis=-1, keepdims=True))

    row_sum = jnp.sum(x, axis=-1, keepdims=True)              # (bn, 1)
    col = lax.broadcasted_iota(jnp.int32, x.shape, 1)         # (bn, C)
    # logit at the target class via a one-hot masked lane reduce (no gather).
    # TODO(synk): out-of-range targets silently contribute x_t = 0 here,
    # whereas torch.Tensor.scatter_ would raise.
    x_t = jnp.sum(jnp.where(col == tgt, x, 0.0), axis=-1, keepdims=True)

    conf = 1.0 - smoothing
    # classes == 1 guard: torch fills true_dist with inf then overwrites the
    # only entry, yielding 0; off = 0 here reproduces that without the inf.
    off = smoothing / (classes - 1) if classes > 1 else 0.0

    # sum_c(-true_dist * logp) == -(off * sum_c logp + (conf - off) * logp_t)
    loss_rows = -(off * (row_sum - classes * lse)
                  + (conf - off) * (x_t - lse))               # (bn, 1)

    # Mask rows past N (tail of the last, partial tile). NOTE: keep this a
    # select (jnp.where), NOT a 0/1-mask multiply — the overhanging rows read
    # undefined memory and may carry Inf/NaN that a multiply would propagate.
    tile = s * tiles_per_split + i                            # logical tile id
    row = lax.broadcasted_iota(jnp.int32, loss_rows.shape, 0) # (bn, 1)
    valid = (tile * block_n + row) < total_n
    acc_ref[...] = acc_ref[...] + jnp.where(valid, loss_rows, 0.0)

    @pl.when(i == tiles_per_split - 1)
    def _():
        # single cross-sublane reduce + single store per split
        out_ref[0] = jnp.sum(acc_ref[...], axis=0, keepdims=True)


def _vmem_capacity_bytes():
    try:
        return int(pltpu.get_tpu_info().vmem_capacity_bytes)
    except Exception:
        return 64 * 1024 * 1024    # conservative: v7x per-TensorCore VMEM


def _default_num_splits():
    try:
        kind = jax.devices()[0].device_kind.lower()
    except Exception:
        return 1
    # v5e/v6e expose a single TensorCore per chip: a 2-way split there is just
    # a serial outer loop plus an extra partial store. v7x has 2 TCs and gets
    # them via the leading "parallel" grid axis.
    return 2 if "v7" in kind else 1


def _pick_block_n(n_rows, n_classes, itemsize, block_budget_bytes):
    """Largest batch tile whose full VMEM footprint fits the block budget."""
    sub = {4: 8, 2: 16, 1: 32}.get(itemsize, 8)   # sublane packing minimum
    pad_row = 128 * 4                              # (bn, 1) tiles lane-pad to 128
    # double-buffered pred + target input tiles, the (bn,1) f32 accumulator,
    # and ~4 full-tile f32 temporaries live inside the kernel body.
    per_row = 2 * (n_classes * itemsize + pad_row) + pad_row + 4 * n_classes * 4
    bn = max(sub, block_budget_bytes // per_row)
    bn = min(bn, 65536)
    bn = (bn // sub) * sub
    if n_rows <= sub:
        return n_rows                              # whole (tiny) batch, one tile
    return max(sub, min(bn, (n_rows // sub) * sub))


def _xla_small_c_fallback(pred, target, classes, smoothing):
    """C < 128: lanes would be mostly wasted; plain XLA is already at roofline."""
    logp = jax.nn.log_softmax(pred.astype(jnp.float32), axis=-1)
    conf = 1.0 - smoothing
    off = smoothing / (classes - 1) if classes > 1 else 0.0
    logp_t = jnp.take_along_axis(
        logp, target.astype(jnp.int32)[:, None], axis=-1)[:, 0]
    loss_rows = -(off * jnp.sum(logp, axis=-1) + (conf - off) * logp_t)
    return jnp.mean(loss_rows)


def label_smoothing_loss(pred, target, *, classes, smoothing=0.1,
                         block_n=None, num_splits=None,
                         min_pallas_classes=128, force_pallas=False):
    """pred: (N, C) float, target: (N,) int -> scalar float32 loss."""
    N, C = pred.shape
    assert C == classes

    if C < min_pallas_classes and not force_pallas:
        return _xla_small_c_fallback(pred, target, classes, smoothing)

    itemsize = jnp.dtype(pred.dtype).itemsize
    vmem_cap = _vmem_capacity_bytes()
    # Budget for pipeline buffers + in-body temporaries; re-derived per chip
    # (v7x: 64 MiB/TC -> ~38 MiB of blocks, v5e/v6e: 128 MiB -> up to 72 MiB).
    block_budget = min(72 << 20, (vmem_cap * 3) // 5)
    if block_n is None:
        block_n = _pick_block_n(N, C, itemsize, block_budget)
    num_tiles = int(pl.cdiv(N, block_n))

    if num_splits is None:
        num_splits = _default_num_splits()
    num_splits = max(1, min(int(num_splits), num_tiles))
    # Only split at an exact tile boundary: a cdiv-padded split would re-DMA a
    # full clamped tile from HBM just to have it masked out.
    if num_tiles % num_splits != 0:
        num_splits = 1
    tiles_per_split = num_tiles // num_splits

    tgt2d = target.astype(jnp.int32).reshape(N, 1)

    def in_map(s, i):
        return (s * tiles_per_split + i, 0)

    kernel = functools.partial(
        _label_smoothing_kernel,
        classes=C, smoothing=float(smoothing), total_n=N,
        block_n=block_n, tiles_per_split=tiles_per_split)

    # VMEM limit computed from actual buffer sizes (not a fixed 48 MiB):
    # double-buffered inputs, lane-padded (bn,1) target/accumulator tiles,
    # ~4 full-tile f32 temporaries, plus compiler headroom; capped below the
    # chip's physical VMEM.
    pad_row = 128 * 4
    pred_buf = block_n * C * itemsize
    est = (2 * (pred_buf + block_n * pad_row)
           + block_n * pad_row
           + 4 * block_n * C * 4)
    vmem_limit = int(min(max(est + (12 << 20), 32 << 20),
                         max(vmem_cap - (4 << 20), 32 << 20)))

    partials = pl.pallas_call(
        kernel,
        out_shape=jax.ShapeDtypeStruct((num_splits, 1, 1), jnp.float32),
        grid_spec=pltpu.PrefetchScalarGridSpec(
            num_scalar_prefetch=0,
            grid=(num_splits, tiles_per_split),
            in_specs=[
                pl.BlockSpec((block_n, C), in_map),   # logits tile
                pl.BlockSpec((block_n, 1), in_map),   # target tile
            ],
            out_specs=pl.BlockSpec((1, 1, 1), lambda s, i: (s, 0, 0)),
            scratch_shapes=[pltpu.VMEM((block_n, 1), jnp.float32)],
        ),
        compiler_params=pltpu.CompilerParams(
            dimension_semantics=("parallel", "arbitrary"),
            vmem_limit_bytes=vmem_limit,
        ),
    )(pred, tgt2d)

    return jnp.sum(partials) / jnp.float32(N)


def _reference(pred, target, classes, smoothing):
    # Literal translation of the PyTorch module.
    logp = jax.nn.log_softmax(pred.astype(jnp.float32), axis=-1)
    off = smoothing / (classes - 1)
    conf = 1.0 - smoothing
    true_dist = jnp.full_like(logp, off)
    true_dist = true_dist.at[jnp.arange(pred.shape[0]), target].set(conf)
    return jnp.mean(jnp.sum(-true_dist * logp, axis=-1))


if __name__ == "__main__":
    key = jax.random.PRNGKey(0)
    smoothing = 0.1

    # (N, C, dtype, atol, kwargs) — small shapes that still exercise:
    #  multi-tile reduction + masked tail, the even 2-way split, auto sizing,
    #  the bf16 cast path, and the small-C XLA fallback.
    cases = [
        (72, 128, jnp.float32, 1e-5, dict(block_n=16)),
        (64, 128, jnp.float32, 1e-5, dict(block_n=16, num_splits=2)),
        (40, 128, jnp.float32, 1e-5, dict()),
        (48, 128, jnp.bfloat16, 2e-4, dict(block_n=16)),
        (40, 32, jnp.float32, 1e-5, dict()),          # XLA fallback (C < 128)
    ]

    for idx, (n, c, dtype, atol, kw) in enumerate(cases):
        kp, kt = jax.random.split(jax.random.fold_in(key, idx))
        pred = jax.random.normal(kp, (n, c), dtype=jnp.float32).astype(dtype)
        target = jax.random.randint(kt, (n,), 0, c, dtype=jnp.int32)

        loss = label_smoothing_loss(pred, target, classes=c,
                                    smoothing=smoothing, **kw)
        loss = jax.block_until_ready(loss)

        ref = _reference(pred, target, c, smoothing)
        assert jnp.allclose(loss, ref, atol=atol, rtol=1e-4), (idx, loss, ref)

    print("KERNEL_OK")
</pallas_src>

<mosaic_0001>
module attributes {stable_mosaic.version = 11 : i64} {
  func.func @_label_smoothing_kernel(%arg0: i32, %arg1: i32, %arg2: memref<16x128xf32, #tpu.memory_space<vmem>>, %arg3: memref<16x1xi32, #tpu.memory_space<vmem>>, %arg4: memref<1x1x1xf32, #tpu.memory_space<vmem>>, %arg5: memref<16x1xf32, #tpu.memory_space<vmem>>) attributes {dimension_semantics = [#tpu.dimension_semantics<parallel>, #tpu.dimension_semantics<arbitrary>], iteration_bounds = array<i64: 1, 5>, scalar_prefetch = 0 : i64, scratch_operands = 1 : i64, tpu.core_type = #tpu.core_type<tc>, window_params = [{transform_indices = @transform_0, window_bounds = array<i64: 16, 128>}, {transform_indices = @transform_1, window_bounds = array<i64: 16, 1>}, {transform_indices = @transform_2, window_bounds = array<i64: 1, 1, 1>}]} {
    %c0_i32 = arith.constant 0 : i32
    %0 = arith.cmpi eq, %arg1, %c0_i32 : i32
    %1 = arith.extui %0 : i1 to i32
    %c0_i32_0 = arith.constant 0 : i32
    %2 = arith.cmpi ne, %1, %c0_i32_0 : i32
    scf.if %2 {
      %cst_18 = arith.constant 0.000000e+00 : f32
      %50 = vector.broadcast %cst_18 : f32 to vector<16x1xf32>
      %c0_19 = arith.constant 0 : index
      %c0_20 = arith.constant 0 : index
      %51 = vector.load %arg5[%c0_19, %c0_20] : memref<16x1xf32, #tpu.memory_space<vmem>>, vector<16x1xf32>
      tpu.vector_store %arg5[%c0_19, %c0_20], %50 {strides = array<i32>} : memref<16x1xf32, #tpu.memory_space<vmem>>, vector<16x1xf32>,
    } else {
    }
    %c0 = arith.constant 0 : index
    %c0_1 = arith.constant 0 : index
    %3 = vector.load %arg2[%c0, %c0_1] : memref<16x128xf32, #tpu.memory_space<vmem>>, vector<16x128xf32>
    %c0_2 = arith.constant 0 : index
    %c0_3 = arith.constant 0 : index
    %4 = vector.load %arg3[%c0_2, %c0_3] : memref<16x1xi32, #tpu.memory_space<vmem>>, vector<16x1xi32>
    %cst = arith.constant dense<0xFF800000> : vector<16xf32>
    %5 = vector.multi_reduction <maximumf>, %3, %cst [1] : vector<16x128xf32> to vector<16xf32>
    %6 = vector.shape_cast %5 : vector<16xf32> to vector<16x1xf32>
    %7 = vector.broadcast %6 : vector<16x1xf32> to vector<16x128xf32>
    %8 = arith.subf %3, %7 : vector<16x128xf32>
    %9 = math.exp %8 : vector<16x128xf32>
    %cst_4 = arith.constant dense<0.000000e+00> : vector<16xf32>
    %10 = vector.multi_reduction <add>, %9, %cst_4 [1] : vector<16x128xf32> to vector<16xf32>
    %11 = vector.shape_cast %10 : vector<16xf32> to vector<16x1xf32>
    %12 = math.log %11 : vector<16x1xf32>
    %13 = arith.addf %6, %12 : vector<16x1xf32>
    %cst_5 = arith.constant dense<0.000000e+00> : vector<16xf32>
    %14 = vector.multi_reduction <add>, %3, %cst_5 [1] : vector<16x128xf32> to vector<16xf32>
    %15 = vector.shape_cast %14 : vector<16xf32> to vector<16x1xf32>
    %16 = tpu.iota {dimensions = array<i32: 1>} : vector<16x128xi32>
    %17 = vector.broadcast %4 : vector<16x1xi32> to vector<16x128xi32>
    %18 = arith.cmpi eq, %16, %17 : vector<16x128xi32>
    %cst_6 = arith.constant 0.000000e+00 : f32
    %19 = vector.broadcast %cst_6 : f32 to vector<16x128xf32>
    %20 = arith.select %18, %3, %19 : vector<16x128xi1>, vector<16x128xf32>
    %cst_7 = arith.constant dense<0.000000e+00> : vector<16xf32>
    %21 = vector.multi_reduction <add>, %20, %cst_7 [1] : vector<16x128xf32> to vector<16xf32>
    %22 = vector.shape_cast %21 : vector<16xf32> to vector<16x1xf32>
    %cst_8 = arith.constant 1.280000e+02 : f32
    %23 = vector.broadcast %cst_8 : f32 to vector<16x1xf32>
    %24 = arith.mulf %23, %13 : vector<16x1xf32>
    %25 = arith.subf %15, %24 : vector<16x1xf32>
    %cst_9 = arith.constant 7.87401571E-4 : f32
    %26 = vector.broadcast %cst_9 : f32 to vector<16x1xf32>
    %27 = arith.mulf %26, %25 : vector<16x1xf32>
    %28 = arith.subf %22, %13 : vector<16x1xf32>
    %cst_10 = arith.constant 0.899212599 : f32
    %29 = vector.broadcast %cst_10 : f32 to vector<16x1xf32>
    %30 = arith.mulf %29, %28 : vector<16x1xf32>
    %31 = arith.addf %27, %30 : vector<16x1xf32>
    %cst_11 = arith.constant 0.000000e+00 : f32
    %32 = vector.broadcast %cst_11 : f32 to vector<16x1xf32>
    %33 = arith.subf %32, %31 : vector<16x1xf32>
    %c5_i32 = arith.constant 5 : i32
    %34 = arith.muli %arg0, %c5_i32 : i32
    %35 = arith.addi %34, %arg1 : i32
    %36 = tpu.iota {dimensions = array<i32: 0>} : vector<16x1xi32>
    %c16_i32 = arith.constant 16 : i32
    %37 = arith.muli %35, %c16_i32 : i32
    %38 = vector.broadcast %37 : i32 to vector<16x1xi32>
    %39 = arith.addi %38, %36 : vector<16x1xi32>
    %c72_i32 = arith.constant 72 : i32
    %40 = vector.broadcast %c72_i32 : i32 to vector<16x1xi32>
    %41 = arith.cmpi slt, %39, %40 : vector<16x1xi32>
    %c0_12 = arith.constant 0 : index
    %c0_13 = arith.constant 0 : index
    %42 = vector.load %arg5[%c0_12, %c0_13] : memref<16x1xf32, #tpu.memory_space<vmem>>, vector<16x1xf32>
    %cst_14 = arith.constant 0.000000e+00 : f32
    %43 = vector.broadcast %cst_14 : f32 to vector<16x1xf32>
    %44 = arith.select %41, %33, %43 : vector<16x1xi1>, vector<16x1xf32>
    %45 = arith.addf %42, %44 : vector<16x1xf32>
    %c0_15 = arith.constant 0 : index
    %c0_16 = arith.constant 0 : index
    %46 = vector.load %arg5[%c0_15, %c0_16] : memref<16x1xf32, #tpu.memory_space<vmem>>, vector<16x1xf32>
    tpu.vector_store %arg5[%c0_15, %c0_16], %45 {strides = array<i32>} : memref<16x1xf32, #tpu.memory_space<vmem>>, vector<16x1xf32>,
    %c4_i32 = arith.constant 4 : i32
    %47 = arith.cmpi eq, %arg1, %c4_i32 : i32
    %48 = arith.extui %47 : i1 to i32
    %c0_i32_17 = arith.constant 0 : i32
    %49 = arith.cmpi ne, %48, %c0_i32_17 : i32
    scf.if %49 {
      %c0_18 = arith.constant 0 : index
      %c0_19 = arith.constant 0 : index
      %50 = vector.load %arg5[%c0_18, %c0_19] : memref<16x1xf32, #tpu.memory_space<vmem>>, vector<16x1xf32>
      %cst_20 = arith.constant dense<0.000000e+00> : vector<1xf32>
      %51 = vector.multi_reduction <add>, %50, %cst_20 [0] : vector<16x1xf32> to vector<1xf32>
      %52 = vector.shape_cast %51 : vector<1xf32> to vector<1x1xf32>
      %c0_21 = arith.constant 0 : index
      %c0_22 = arith.constant 0 : index
      %c0_23 = arith.constant 0 : index
      %53 = vector.load %arg4[%c0_21, %c0_22, %c0_23] : memref<1x1x1xf32, #tpu.memory_space<vmem>>, vector<1x1x1xf32>
      %54 = vector.shape_cast %53 : vector<1x1x1xf32> to vector<1x1xf32>
      %55 = vector.shape_cast %52 : vector<1x1xf32> to vector<1x1x1xf32>
      tpu.vector_store %arg4[%c0_21, %c0_22, %c0_23], %55 {strides = array<i32>} : memref<1x1x1xf32, #tpu.memory_space<vmem>>, vector<1x1x1xf32>,
    } else {
    }
    return
  }
  func.func @transform_0(%arg0: i32, %arg1: i32) -> (i32, i32) {
    %c5_i32 = arith.constant 5 : i32
    %0 = arith.muli %arg0, %c5_i32 : i32
    %1 = arith.addi %0, %arg1 : i32
    %c0_i32 = arith.constant 0 : i32
    %c0_i32_0 = arith.constant 0 : i32
    return %1, %c0_i32 : i32, i32
  }
  func.func @transform_1(%arg0: i32, %arg1: i32) -> (i32, i32) {
    %c5_i32 = arith.constant 5 : i32
    %0 = arith.muli %arg0, %c5_i32 : i32
    %1 = arith.addi %0, %arg1 : i32
    %c0_i32 = arith.constant 0 : i32
    %c0_i32_0 = arith.constant 0 : i32
    return %1, %c0_i32 : i32, i32
  }
  func.func @transform_2(%arg0: i32, %arg1: i32) -> (i32, i32, i32) {
    %c0_i32 = arith.constant 0 : i32
    %c0_i32_0 = arith.constant 0 : i32
    %c0_i32_1 = arith.constant 0 : i32
    return %arg0, %c0_i32, %c0_i32_0 : i32, i32, i32
  }
}

</mosaic_0001>

<llo_original>
// kernel: tpu_custom_call.1
$region0: #{tpu_custom_call.1}
  #allocation0 [shape = 'u32[]', space=smem, size = 0x4, offset = 0x4, fixed_abs, tag = 'smem constant byte address 0x4 - core index']
  #allocation1 [shape = 'u32[72,128]{1,0:T(1,128)}', space=vmem, size = 0x9000, scoped, tag = 'internal scratch']
  #allocation2 [shape = 'f32[16,1]{1,0:T(8,128)}', space=vmem, size = 0x2000, scoped, tag = 'scratch operand']
  %s0 = inlined_call_operand.vmem [shape: f32[72,128], index: 0, kind: input, shape index: {}]
  %s1 = inlined_call_operand.vmem [shape: s32[72,1], index: 1, kind: input, shape index: {}]
  %s2 = inlined_call_operand.hbm [shape: f32[1,1,1], index: 2, kind: output, shape index: {}]
  %s3 = sld [smem:[#allocation0]]
  $region49: #{tpu_custom_call.1} parent=0
    _
  %s5 = ssub.s32 1, %s3
  %s6 = scalar_select 0, %s5, %s3
  $region1: #{tpu_custom_call.1} parent=0
    #allocation3 [shape = 'u8[512]{0}', space=vmem, size = 0x400, scoped, tag = 'output window, operand 0, single buffered']
    #allocation4 [shape = 's32[2]{0}', space=sflag, size = 0x8, scoped, tag = 'scoped memory for tpu_custom_call.1']
    %7 = vsyncpa [#allocation4], 0
    loop: start=0, step=1, limit=7
    $region2: #{tpu_custom_call.1} parent=1 // loop_pre_header
      _
    $region3: #{tpu_custom_call.1} parent=1 // loop_header
      %s9 = sphi 0, %s13
      %p10 = scmp.ge.s32.totalorder %s9, 7
      %s16 = sphi 0, %s28
      %s17 = sphi 0, %s24
      %s18 = sphi 0, %s16
      %s19 = sphi 0, %s17
      %s20 = sphi 0, %s18
      %s21 = sphi 0, %s19
      %s35 = sphi 0, %s37
      %s38 = sphi 0, %s35
      %s39 = sphi 0, %s38
      %s55 = sphi 0, %s39
      %s65 = sphi 0, %s67
      %s68 = sphi 0, %s65
      %s69 = sphi 0, %s68
      %s85 = sphi 0, %s69
      %s91 = sphi 0, %s93
      %s94 = sphi 0, %s91
      %s95 = sphi 0, %s94
      %s111 = sphi 0, %s95
    $region4: #{tpu_custom_call.1} parent=1 // loop_header_branch
      %12 = sbr.rel (%p10) target = $region8
    $region5: #{tpu_custom_call.1} parent=1 // loop_body
      %s14 = ssub.s32 %s9, 1
      %s15 = ssub.s32 %s9, 2
      %s22 = sadd.s32 1, %s17
      %p23 = scmp.ge.s32.totalorder %s22, 5
      %s24 = scalar_select %p23, 0, %s22
      %s25 = sadd.s32 1, %s16
      %s26 = scalar_select %p23, %s25, %s16
      %p27 = scmp.ge.s32.totalorder %s26, 1
      %s28 = scalar_select %p27, 0, %s26
      %s29 = smul.u32 %s16, 5
      %s30 = sadd.s32 %s29, %s17
      %s31 = smul.u32 %s28, 5
      %s32 = sadd.s32 %s31, %s24
      %s33 = ssub.s32 %s30, %s32
      %p34 = scmp.eq.s32.totalorder %s33, 0
      %s36 = sadd.s32 %s35, 1
      %s37 = scalar_select %p34, %s35, %s36
      %p40 = pneg %p34
      %p41 = scmp.eq.s32.totalorder %s9, 4
      %p42 = por %p40, %p41
      %p43 = scmp.ne.s32.totalorder %s35, %s38
      %p44 = scmp.eq.s32.totalorder %s9, 0
      %p45 = por %p43, %p44
      %p46 = scmp.ne.s32.totalorder %s35, %s38
      %p47 = scmp.eq.s32.totalorder %s14, 4
      %p48 = por %p46, %p47
      %p49 = scmp.ne.s32.totalorder %s38, %s39
      %p50 = scmp.eq.s32.totalorder %s14, 0
      %p51 = por %p49, %p50
      %p52 = scmp.ne.s32.totalorder %s38, %s39
      %p53 = scmp.eq.s32.totalorder %s15, 4
      %p54 = por %p52, %p53
      %p56 = scmp.ne.s32.totalorder %s39, %s55
      %p57 = scmp.eq.s32.totalorder %s15, 0
      %p58 = por %p56, %p57
      %s59 = smul.u32 %s16, 5
      %s60 = sadd.s32 %s59, %s17
      %s61 = smul.u32 %s28, 5
      %s62 = sadd.s32 %s61, %s24
      %s63 = ssub.s32 %s60, %s62
      %p64 = scmp.eq.s32.totalorder %s63, 0
      %s66 = sadd.s32 %s65, 1
      %s67 = scalar_select %p64, %s65, %s66
      %p70 = pneg %p64
      %p71 = scmp.eq.s32.totalorder %s9, 4
      %p72 = por %p70, %p71
      %p73 = scmp.ne.s32.totalorder %s65, %s68
      %p74 = scmp.eq.s32.totalorder %s9, 0
      %p75 = por %p73, %p74
      %p76 = scmp.ne.s32.totalorder %s65, %s68
      %p77 = scmp.eq.s32.totalorder %s14, 4
      %p78 = por %p76, %p77
      %p79 = scmp.ne.s32.totalorder %s68, %s69
      %p80 = scmp.eq.s32.totalorder %s14, 0
      %p81 = por %p79, %p80
      %p82 = scmp.ne.s32.totalorder %s68, %s69
      %p83 = scmp.eq.s32.totalorder %s15, 4
      %p84 = por %p82, %p83
      %p86 = scmp.ne.s32.totalorder %s69, %s85
      %p87 = scmp.eq.s32.totalorder %s15, 0
      %p88 = por %p86, %p87
      %s89 = ssub.s32 %s16, %s28
      %p90 = scmp.eq.s32.totalorder %s89, 0
      %s92 = sadd.s32 %s91, 1
      %s93 = scalar_select %p90, %s91, %s92
      %p96 = pneg %p90
      %p97 = scmp.eq.s32.totalorder %s9, 4
      %p98 = por %p96, %p97
      %p99 = scmp.ne.s32.totalorder %s91, %s94
      %p100 = scmp.eq.s32.totalorder %s9, 0
      %p101 = por %p99, %p100
      %p102 = scmp.ne.s32.totalorder %s91, %s94
      %p103 = scmp.eq.s32.totalorder %s14, 4
      %p104 = por %p102, %p103
      %p105 = scmp.ne.s32.totalorder %s94, %s95
      %p106 = scmp.eq.s32.totalorder %s14, 0
      %p107 = por %p105, %p106
      %p108 = scmp.ne.s32.totalorder %s94, %s95
      %p109 = scmp.eq.s32.totalorder %s15, 4
      %p110 = por %p108, %p109
      %p112 = scmp.ne.s32.totalorder %s95, %s111
      %p113 = scmp.eq.s32.totalorder %s15, 0
      %p114 = por %p112, %p113
      %p115 = scmp.le.s32.totalorder 1, %s9
      %p116 = scmp.lt.s32.totalorder %s9, 6
      %p117 = pnand %p115, %p116
      %p118 = pneg %p117
      // Predicated region
      $region9: #{tpu_custom_call.1} parent=5 // pred_check
        _
      $region10: #{tpu_custom_call.1} parent=5 // pred_check_branch
        %120 = sbr.rel (%p117) target = $region12
      $region11: #{tpu_custom_call.1} parent=5 // pred_region
        %s121 = ssub.s32 %s9, 1
      $region12: #{tpu_custom_call.1} parent=5 // pred_fallthru
        _
      %p122 = scmp.lt.s32.totalorder %s9, 5
      // Predicated region
      $region13: #{tpu_custom_call.1} parent=5 // pred_check
        %p123 = pneg %p122
      $region14: #{tpu_custom_call.1} parent=5 // pred_check_branch
        %125 = sbr.rel (%p123) target = $region16
      $region15: #{tpu_custom_call.1} parent=5 // pred_region
        // Predicated region
        $region17: #{tpu_custom_call.1} parent=15 // pred_check
          %p126 = pneg %p45
        $region18: #{tpu_custom_call.1} parent=15 // pred_check_branch
          %128 = sbr.rel (%p126) target = $region20
        $region19: #{tpu_custom_call.1} parent=15 // pred_region
          %s129 = smul.u32 %s16, 5
          %s130 = sadd.s32 %s129, %s17
          %s131 = smul.u32 2, %s130
          %s132 = ssub.s32 9, %s131
          %p133 = scmp.lt.s32.totalorder %s132, 2
          %s134 = scalar_select %p133, %s132, 2
          %s135 = smul.u32 8, %s134
          %p136 = scmp.lt.s32.totalorder %s131, 8
          %s137 = scalar_select %p136, %s131, 8
          %s138 = smul.addr %s137, 8
          %s139 = scalar_lea.vmem %s0, %s138
          %s140 = smul.u32 %s16, 5
          %s141 = sadd.s32 %s140, %s17
          %s142 = smul.u32 2, %s141
          %s143 = ssub.s32 9, %s142
          %p144 = scmp.lt.s32.totalorder %s143, 2
          %s145 = scalar_select %p144, %s143, 2
          %s146 = smul.u32 8, %s145
        $region20: #{tpu_custom_call.1} parent=15 // pred_fallthru
          _
        // Predicated region
        $region21: #{tpu_custom_call.1} parent=15 // pred_check
          %p147 = pneg %p75
        $region22: #{tpu_custom_call.1} parent=15 // pred_check_branch
          %149 = sbr.rel (%p147) target = $region24
        $region23: #{tpu_custom_call.1} parent=15 // pred_region
          %s150 = smul.u32 %s16, 5
          %s151 = sadd.s32 %s150, %s17
          %s152 = smul.u32 2, %s151
          %s153 = ssub.s32 9, %s152
          %p154 = scmp.lt.s32.totalorder %s153, 2
          %s155 = scalar_select %p154, %s153, 2
          %s156 = smul.u32 8, %s155
          %p157 = scmp.lt.s32.totalorder %s152, 8
          %s158 = scalar_select %p157, %s152, 8
          %s159 = smul.addr %s158, 8
          %s160 = scalar_lea.vmem %s1, %s159
          %s161 = smul.u32 %s16, 5
          %s162 = sadd.s32 %s161, %s17
          %s163 = smul.u32 2, %s162
          %s164 = ssub.s32 9, %s163
          %p165 = scmp.lt.s32.totalorder %s164, 2
          %s166 = scalar_select %p165, %s164, 2
          %s167 = smul.u32 8, %s166
        $region24: #{tpu_custom_call.1} parent=15 // pred_fallthru
          _
      $region16: #{tpu_custom_call.1} parent=5 // pred_fallthru
        _
      %p168 = scmp.le.s32.totalorder 1, %s9
      %p169 = scmp.lt.s32.totalorder %s9, 6
      %p170 = pnand %p168, %p169
      %p171 = pneg %p170
      // Predicated region
      $region25: #{tpu_custom_call.1} parent=5 // pred_check
        _
      $region26: #{tpu_custom_call.1} parent=5 // pred_check_branch
        %173 = sbr.rel (%p170) target = $region28
      $region27: #{tpu_custom_call.1} parent=5 // pred_region
        %s174 = ssub.s32 %s9, 1
        %s175 = smul.u32 %s18, 5
        %s176 = sadd.s32 %s175, %s19
        %s177 = smul.u32 2, %s176
        %s178 = ssub.s32 9, %s177
        %p179 = scmp.lt.s32.totalorder %s178, 2
        %s180 = scalar_select %p179, %s178, 2
        %s181 = smul.u32 8, %s180
        %p182 = scmp.lt.s32.totalorder %s177, 8
        %s183 = scalar_select %p182, %s177, 8
        %s184 = smul.addr %s183, 8
        %s185 = scalar_lea.vmem %s0, %s184
        %p186 = pneg %p51
        %p187 = pneg %p48
        %s188 = smul.u32 %s18, 5
        %s189 = sadd.s32 %s188, %s19
        %s190 = smul.u32 2, %s189
        %s191 = ssub.s32 9, %s190
        %p192 = scmp.lt.s32.totalorder %s191, 2
        %s193 = scalar_select %p192, %s191, 2
        %s194 = smul.u32 8, %s193
        %p195 = scmp.lt.s32.totalorder %s190, 8
        %s196 = scalar_select %p195, %s190, 8
        %s197 = smul.addr %s196, 8
        %s198 = scalar_lea.vmem %s1, %s197
        %p199 = pneg %p81
        %p200 = pneg %p78
        %p201 = pneg %p107
        %p202 = pneg %p104
        %s203 = smul.u32 %s18, 5
        %s204 = sadd.s32 %s203, %s19
        %s205 = smul.u32 2, %s204
        %s206 = ssub.s32 9, %s205
        %p207 = scmp.lt.s32.totalorder %s206, 2
        %s208 = scalar_select %p207, %s206, 2
        %s209 = smul.u32 8, %s208
        %p210 = scmp.lt.s32.totalorder %s205, 8
        %s211 = scalar_select %p210, %s205, 8
        %s212 = smul.addr %s211, 8
        %s213 = scalar_lea.vmem %s0, %s212
        %s214 = smul.u32 %s18, 5
        %s215 = sadd.s32 %s214, %s19
        %s216 = smul.u32 2, %s215
        %s217 = ssub.s32 9, %s216
        %p218 = scmp.lt.s32.totalorder %s217, 2
        %s219 = scalar_select %p218, %s217, 2
        %s220 = smul.u32 8, %s219
        %s221 = smul.u32 %s18, 5
        %s222 = sadd.s32 %s221, %s19
        %s223 = smul.u32 2, %s222
        %s224 = ssub.s32 9, %s223
        %p225 = scmp.lt.s32.totalorder %s224, 2
        %s226 = scalar_select %p225, %s224, 2
        %s227 = smul.u32 8, %s226
        %p228 = scmp.lt.s32.totalorder %s223, 8
        %s229 = scalar_select %p228, %s223, 8
        %s230 = smul.addr %s229, 8
        %s231 = scalar_lea.vmem %s1, %s230
        %s232 = smul.u32 %s18, 5
        %s233 = sadd.s32 %s232, %s19
        %s234 = smul.u32 2, %s233
        %s235 = ssub.s32 9, %s234
        %p236 = scmp.lt.s32.totalorder %s235, 2
        %s237 = scalar_select %p236, %s235, 2
        %s238 = smul.u32 8, %s237
        %p239 = scmp.eq.s32.totalorder %s19, 0
        // Predicated region
        $region29: #{tpu_custom_call.1} parent=27 // pred_check
          %p240 = pneg %p239
        $region30: #{tpu_custom_call.1} parent=27 // pred_check_branch
          %242 = sbr.rel (%p240) target = $region32
        $region31: #{tpu_custom_call.1} parent=27 // pred_region
          %vm243 = vcmask 7168
          %244 = vst.msk [vmem:[#allocation2] sm:$0xff] %vm243, 0.0
          %245 = vst.msk [vmem:[#allocation2 + $0x8] sm:$0xff] %vm243, 0.0
        $region32: #{tpu_custom_call.1} parent=27 // pred_fallthru
          _
        %v246 = vld [vmem:[%s213] sm:$0xff]
        %v247 = vld [vmem:[%s213 + $0x8] sm:$0xff]
        %v248 = vld [vmem:[%s231] sm:$0xff]
        %v249 = vld [vmem:[%s231 + $0x8] sm:$0xff]
        %250 = vmax.xlane.f32.xlu0 %v246
        %v251 = vpop.xlane.xlu0 %250
        %252 = vmax.xlane.f32.xlu0 %v247
        %v253 = vpop.xlane.xlu0 %252
        %v254 = vsub.f32 %v246, %v251
        %v255 = vsub.f32 %v247, %v253
        %v256 = vmul.f32 %v254, 1.442695
        %v257 = vpow.pop %v256
        %v258 = vmul.f32 %v255, 1.442695
        %v259 = vpow.pop %v258
        %260 = vadd.xlane.f32.xlu0 %v257
        %v261 = vpop.xlane.xlu0 %260
        %262 = vadd.xlane.f32.xlu0 %v259
        %v263 = vpop.xlane.xlu0 %262
        %v264 = vlog2.pop %v261
        %v265 = vmul.f32 %v264, 0.6931472
        %v266 = vlog2.pop %v263
        %v267 = vmul.f32 %v266, 0.6931472
        %v268 = vadd.f32 %v251, %v265
        %v269 = vadd.f32 %v253, %v267
        %270 = vadd.xlane.f32.xlu0 %v246
        %v271 = vpop.xlane.xlu0 %270
        %272 = vadd.xlane.f32.xlu0 %v247
        %v273 = vpop.xlane.xlu0 %272
        %v274 = vlaneseq
        %v275 = vand.u32 %v274, 127
        %276 = vset.pattern.permute.xlu0 0
        %277 = vperm.xlu0 %276, %v248
        %v278 = vpop.permute.xlu0 %277
        %279 = vset.pattern.permute.xlu0 0
        %280 = vperm.xlu0 %279, %v249
        %v281 = vpop.permute.xlu0 %280
        %vm282 = vcmp.eq.s32.totalorder %v275, %v278
        %vm283 = vcmp.eq.s32.totalorder %v275, %v281
        %v284 = vsel %vm282, %v246, 0.0
        %v285 = vsel %vm283, %v247, 0.0
        %286 = vadd.xlane.f32.xlu0 %v284
        %v287 = vpop.xlane.xlu0 %286
        %288 = vadd.xlane.f32.xlu0 %v285
        %v289 = vpop.xlane.xlu0 %288
        %v290 = vmul.f32 %v268, 128.0
        %v291 = vmul.f32 %v269, 128.0
        %v292 = vsub.f32 %v271, %v290
        %v293 = vsub.f32 %v273, %v291
        %v294 = vmul.f32 %v292, 0.0007874016
        %v295 = vmul.f32 %v293, 0.0007874016
        %v296 = vsub.f32 %v287, %v268
        %v297 = vsub.f32 %v289, %v269
        %v298 = vmul.f32 %v296, 0.8992126
        %v299 = vmul.f32 %v297, 0.8992126
        %v300 = vadd.f32 %v294, %v298
        %v301 = vadd.f32 %v295, %v299
        %v302 = vsub.f32 0.0, %v300
        %v303 = vsub.f32 0.0, %v301
        %s304 = smul.u32 %s18, 5
        %s305 = sadd.s32 %s304, %s19
        %v306 = vlaneseq
        %v307 = vshrl.u32 %v306, 7
        %v308 = vadd.s32 %v307, 8
        %s309 = smul.u32 %s305, 16
        %v310 = vstv %s309
        %v311 = vadd.s32 %v310, %v307
        %v312 = vadd.s32 %v310, %v308
        %vm313 = vcmp.lt.s32.totalorder %v311, 72
        %vm314 = vcmp.lt.s32.totalorder %v312, 72
        %v315 = vld [vmem:[#allocation2] sm:$0xff]
        %v316 = vld [vmem:[#allocation2 + $0x8] sm:$0xff]
        %v317 = vsel %vm313, %v302, 0.0
        %v318 = vsel %vm314, %v303, 0.0
        %v319 = vadd.f32 %v315, %v317
        %v320 = vadd.f32 %v316, %v318
        %vm321 = vcmask 7168
        %322 = vst.msk [vmem:[#allocation2] sm:$0xff] %vm321, %v319
        %323 = vst.msk [vmem:[#allocation2 + $0x8] sm:$0xff] %vm321, %v320
        %p324 = scmp.eq.s32.totalorder %s19, 4
        // Predicated region
        $region33: #{tpu_custom_call.1} parent=27 // pred_check
          %p325 = pneg %p324
        $region34: #{tpu_custom_call.1} parent=27 // pred_check_branch
          %327 = sbr.rel (%p325) target = $region36
        $region35: #{tpu_custom_call.1} parent=27 // pred_region
          %v328 = vld [vmem:[#allocation2] sm:$0xff]
          %v329 = vld [vmem:[#allocation2 + $0x8] sm:$0xff]
          %v330 = vsel %vm321, %v328, 0.0
          %v331 = vsel %vm321, %v329, 0.0
          %v332 = vadd.f32 %v330, %v331
          %v333 = vrot.slane %v332, 4
          %v334 = vadd.f32 %v332, %v333
          %v335 = vrot.slane %v334, 2
          %v336 = vadd.f32 %v334, %v335
          %v337 = vrot.slane %v336, 1
          %v338 = vadd.f32 %v336, %v337
          %vm339 = vcmask 0
          %340 = vst.msk [vmem:[#allocation3] sm:$0x1] %vm339, %v338
        $region36: #{tpu_custom_call.1} parent=27 // pred_fallthru
          _
        // Predicated region
        $region37: #{tpu_custom_call.1} parent=27 // pred_check
          %p341 = pneg %p104
        $region38: #{tpu_custom_call.1} parent=27 // pred_check_branch
          %343 = sbr.rel (%p341) target = $region40
        $region39: #{tpu_custom_call.1} parent=27 // pred_region
          %345 = vsyncadd [#allocation4], 0
          %s346 = scalar_lea.hbm %s2, %s18
          %s348 = sshll.u32 [#allocation3], 4
          %s349 = int_to_ptr.vmem [resolvable:$true] %s348
          %s350 = sshll.u32 %s346, 4
          %s351 = int_to_ptr.hbm [resolvable:$true] %s350
          %353 = dma.vmem_to_hbm [thread:$0]  %s349, 16, %s351, [#allocation4]
        $region40: #{tpu_custom_call.1} parent=27 // pred_fallthru
          _
        // Predicated region
        $region41: #{tpu_custom_call.1} parent=27 // pred_check
          %p354 = pneg %p104
        $region42: #{tpu_custom_call.1} parent=27 // pred_check_branch
          %356 = sbr.rel (%p354) target = $region44
        $region43: #{tpu_custom_call.1} parent=27 // pred_region
          %358 = dma.done [#allocation4], 16
        $region44: #{tpu_custom_call.1} parent=27 // pred_fallthru
          _
      $region28: #{tpu_custom_call.1} parent=5 // pred_fallthru
        _
      %p359 = scmp.le.s32.totalorder 2, %s9
      // Predicated region
      $region45: #{tpu_custom_call.1} parent=5 // pred_check
        %p360 = pneg %p359
      $region46: #{tpu_custom_call.1} parent=5 // pred_check_branch
        %362 = sbr.rel (%p360) target = $region48
      $region47: #{tpu_custom_call.1} parent=5 // pred_region
        %s363 = ssub.s32 %s9, 2
      $region48: #{tpu_custom_call.1} parent=5 // pred_fallthru
        _
    $region6: #{tpu_custom_call.1} parent=1 // loop_footer
      %s13 = sadd.s32 1, %s9
    $region7: #{tpu_custom_call.1} parent=1 // loop_footer_branch
      %8 = sbr.rel target = $region3
    $region8: #{tpu_custom_call.1} parent=1 // loop_exit
      _
    %364 = vsyncpa [#allocation4], 1
    %s365 = scalar_lea.sflag [#allocation4], 1
    %366 = vsyncpa %s365, 1

</llo_original>
